<compile_context>
chip_gen: v5e
topology: v5e:2x2
jax: 0.10.0
libtpu: 0.0.40
codegen_flags: <defaults>
</compile_context>

<pallas_src>
import jax
import jax.numpy as jnp
from jax import lax
from jax.experimental import pallas as pl
from jax.experimental.pallas import tpu as pltpu

BN_EPS = 1e-5
LANE = 128


def _round_up(n, m):
    return ((n + m - 1) // m) * m


# ----------------------------------------------------------------------------
# Kernel
# ----------------------------------------------------------------------------
def _fc_kernel(scalars_ref, x_ref, w1_ref, b1_ref, w2_ref, b2_ref,
               w3_ref, b3_ref, o_ref):
    # scalars_ref lives in SMEM: [prelu_alpha1, prelu_alpha2, coeff]
    a1 = scalars_ref[0]
    a2 = scalars_ref[1]
    c = scalars_ref[2]
    one_minus_c = 1.0 - c

    x = x_ref[...]

    # layer 1: (BN-folded) Linear -> PReLU   [Dropout(0.1) is identity in eval]
    h = jnp.dot(x.astype(w1_ref.dtype), w1_ref[...],
                preferred_element_type=jnp.float32) + b1_ref[...]
    h = jnp.where(h >= 0.0, h, a1 * h)

    # layer 2: (BN-folded) Linear -> PReLU   [Dropout(0.1) is identity in eval]
    h = jnp.dot(h.astype(w2_ref.dtype), w2_ref[...],
                preferred_element_type=jnp.float32) + b2_ref[...]
    h = jnp.where(h >= 0.0, h, a2 * h)

    # layer 3: Linear
    y = jnp.dot(h.astype(w3_ref.dtype), w3_ref[...],
                preferred_element_type=jnp.float32) + b3_ref[...]

    # residual mix: coeff * y + (1 - coeff) * X
    # Re-read x here instead of holding the earlier load across the matmuls.
    xr = x_ref[...].astype(jnp.float32)
    o_ref[...] = (c * y + one_minus_c * xr).astype(o_ref.dtype)


# ----------------------------------------------------------------------------
# Parameter handling
# ----------------------------------------------------------------------------
def init_raw_params(key, in_dim, hid1, hid2, out_dim, par):
    """Raw parameters with PyTorch-style shapes (Linear weight is (out, in))."""
    ks = jax.random.split(key, 6)

    def lin(kw, kb, fan_in, fan_out):
        bound = 1.0 / jnp.sqrt(jnp.float32(fan_in))
        w = jax.random.uniform(kw, (fan_out, fan_in), jnp.float32, -bound, bound)
        b = jax.random.uniform(kb, (fan_out,), jnp.float32, -bound, bound)
        return w, b

    w1, b1 = lin(ks[0], ks[1], in_dim, hid1)
    w2, b2 = lin(ks[2], ks[3], hid1, hid2)
    w3, b3 = lin(ks[4], ks[5], hid2, out_dim)

    def bn(dim):
        return (jnp.ones((dim,), jnp.float32),    # gamma
                jnp.zeros((dim,), jnp.float32),   # beta
                jnp.zeros((dim,), jnp.float32),   # running_mean
                jnp.ones((dim,), jnp.float32))    # running_var

    g1, be1, m1, v1 = bn(hid1)
    g2, be2, m2, v2 = bn(hid2)

    return dict(
        w1=w1, b1=b1, g1=g1, be1=be1, m1=m1, v1=v1,
        a1=jnp.full((1,), 0.25, jnp.float32),      # PReLU(num_parameters=1) init
        w2=w2, b2=b2, g2=g2, be2=be2, m2=m2, v2=v2,
        a2=jnp.full((1,), 0.25, jnp.float32),
        w3=w3, b3=b3,
        coeff=jnp.full((1,), par, jnp.float32),    # nn.Parameter(torch.tensor([par]))
    )


def prepare_params(raw, dtype=jnp.float32):
    """Fold eval-mode BN into the linears, transpose to (in, out), lane-pad ONLY
    the hidden (VMEM-resident weight) dims, and pack the true scalars for SMEM.
    The streamed in_dim/out_dim stay at their native widths."""
    in_dim = raw["w1"].shape[1]
    hid1 = raw["w1"].shape[0]
    hid2 = raw["w2"].shape[0]
    out_dim = raw["w3"].shape[0]
    assert out_dim == in_dim, "residual mix requires out_dim == in_dim"

    def fold(w, b, g, beta, mean, var):
        s = g * lax.rsqrt(var + BN_EPS)           # per-output-feature scale
        wt = (w * s[:, None]).T                   # (in, out), BN folded in
        bf = (b - mean) * s + beta
        return wt, bf

    w1, b1 = fold(raw["w1"], raw["b1"], raw["g1"], raw["be1"], raw["m1"], raw["v1"])
    w2, b2 = fold(raw["w2"], raw["b2"], raw["g2"], raw["be2"], raw["m2"], raw["v2"])
    w3, b3 = raw["w3"].T, raw["b3"]

    h1_p = _round_up(hid1, LANE)
    h2_p = _round_up(hid2, LANE)

    def pad_mat(w, rp, cp):
        buf = jnp.zeros((rp, cp), dtype)
        return buf.at[: w.shape[0], : w.shape[1]].set(w.astype(dtype))

    def pad_row(b, cp):
        buf = jnp.zeros((1, cp), jnp.float32)
        return buf.at[0, : b.shape[0]].set(b.astype(jnp.float32))

    scalars = jnp.stack(
        [raw["a1"][0], raw["a2"][0], raw["coeff"][0]]).astype(jnp.float32)

    return dict(
        w1=pad_mat(w1, in_dim, h1_p), b1=pad_row(b1, h1_p),
        w2=pad_mat(w2, h1_p, h2_p), b2=pad_row(b2, h2_p),
        w3=pad_mat(w3, h2_p, out_dim), b3=pad_row(b3, out_dim),
        scalars=scalars,
        in_dim=in_dim, out_dim=out_dim,
    )


# ----------------------------------------------------------------------------
# Tile selection
# ----------------------------------------------------------------------------
def _pick_batch_tile(B, in_dim, out_dim, h1_p, h2_p, x_bytes,
                     block_rows=2048, vmem_budget_bytes=24 << 20):
    # >= 2 grid steps once the batch allows it (v7x: 2 TCs, batch axis is
    # "parallel"); sublane-aligned; capped at block_rows.
    tm = max(8, min(block_rows, _round_up(pl.cdiv(B, 2), 8)))

    def per_step_vmem(t):
        streams = 2 * t * (in_dim + out_dim) * x_bytes          # double-buffered x/out tiles
        live = t * (in_dim + max(h1_p, h2_p) + out_dim) * 4     # live f32 intermediates (rough)
        return streams + live

    while tm > 8 and per_step_vmem(tm) > vmem_budget_bytes:
        tm = max(8, _round_up(tm // 2, 8))
    return tm


# ----------------------------------------------------------------------------
# Forward
# ----------------------------------------------------------------------------
def fully_connected_forward(x, prep, block_rows=2048):
    """x: (B, in_dim). prep: output of prepare_params.

    For bf16 streams, pass x already cast to bf16 and prepare_params(dtype=bf16);
    accumulation stays f32 via preferred_element_type."""
    B, in_dim = x.shape
    assert in_dim == prep["in_dim"]
    out_dim = prep["out_dim"]

    h1_p = prep["w1"].shape[1]
    h2_p = prep["w2"].shape[1]
    x_bytes = jnp.dtype(x.dtype).itemsize

    tm = _pick_batch_tile(B, in_dim, out_dim, h1_p, h2_p, x_bytes,
                          block_rows=block_rows)
    grid = (pl.cdiv(B, tm),)

    weight_bytes = sum(
        prep[k].size * jnp.dtype(prep[k].dtype).itemsize
        for k in ("w1", "b1", "w2", "b2", "w3", "b3"))
    cost = pl.CostEstimate(
        flops=2 * B * (in_dim * h1_p + h1_p * h2_p + h2_p * out_dim),
        transcendentals=0,
        bytes_accessed=B * (in_dim + out_dim) * x_bytes + weight_bytes,
    )

    in_specs = [
        pl.BlockSpec(memory_space=pltpu.MemorySpace.SMEM),     # scalars [a1, a2, coeff]
        pl.BlockSpec((tm, in_dim), lambda i: (i, 0)),          # x tile (pipelined, native width)
        pl.BlockSpec((in_dim, h1_p), lambda i: (0, 0)),        # w1 (resident)
        pl.BlockSpec((1, h1_p), lambda i: (0, 0)),             # b1
        pl.BlockSpec((h1_p, h2_p), lambda i: (0, 0)),          # w2
        pl.BlockSpec((1, h2_p), lambda i: (0, 0)),             # b2
        pl.BlockSpec((h2_p, out_dim), lambda i: (0, 0)),       # w3
        pl.BlockSpec((1, out_dim), lambda i: (0, 0)),          # b3
    ]

    out = pl.pallas_call(
        _fc_kernel,
        out_shape=jax.ShapeDtypeStruct((B, out_dim), x.dtype),
        grid=grid,
        in_specs=in_specs,
        out_specs=pl.BlockSpec((tm, out_dim), lambda i: (i, 0)),
        compiler_params=pltpu.CompilerParams(
            dimension_semantics=("parallel",),
        ),
        cost_estimate=cost,
    )(prep["scalars"], x, prep["w1"], prep["b1"],
      prep["w2"], prep["b2"], prep["w3"], prep["b3"])

    return out


# ----------------------------------------------------------------------------
# Demo / correctness check
# ----------------------------------------------------------------------------
if __name__ == "__main__":
    # Residual `coeff * y + (1 - coeff) * X` implies out_dim == in_dim.
    B, IN_DIM, HID1, HID2, OUT_DIM = 8, 32, 64, 48, 32
    PAR = 0.7

    key = jax.random.PRNGKey(0)
    kx, kp = jax.random.split(key)
    x = jax.random.normal(kx, (B, IN_DIM), jnp.float32)

    raw = init_raw_params(kp, IN_DIM, HID1, HID2, OUT_DIM, PAR)
    prep = prepare_params(raw)   # fold BN, transpose, pad hidden dims (f32 check)

    out = fully_connected_forward(x, prep)
    out = jax.block_until_ready(out)

    # Pure-JAX reference on the RAW (unfolded, unpadded) params — true module
    # semantics in eval mode.
    def ref(x, p):
        h = x @ p["w1"].T + p["b1"]
        h = (h - p["m1"]) * lax.rsqrt(p["v1"] + BN_EPS) * p["g1"] + p["be1"]
        h = jnp.where(h >= 0, h, p["a1"] * h)
        h = h @ p["w2"].T + p["b2"]
        h = (h - p["m2"]) * lax.rsqrt(p["v2"] + BN_EPS) * p["g2"] + p["be2"]
        h = jnp.where(h >= 0, h, p["a2"] * h)
        y = h @ p["w3"].T + p["b3"]
        c = p["coeff"][0]
        return c * y + (1.0 - c) * x

    ref_out = ref(x, raw)
    assert out.shape == (B, OUT_DIM)
    assert jnp.allclose(out, ref_out, atol=1e-4, rtol=1e-4), (
        float(jnp.max(jnp.abs(out - ref_out))))
    print("KERNEL_OK")
</pallas_src>

<mosaic_0001>
module attributes {stable_mosaic.version = 11 : i64} {
  func.func @_fc_kernel(%arg0: i32, %arg1: memref<3xf32, #tpu.memory_space<smem>>, %arg2: memref<8x32xf32, #tpu.memory_space<vmem>>, %arg3: memref<32x128xf32, #tpu.memory_space<vmem>>, %arg4: memref<1x128xf32, #tpu.memory_space<vmem>>, %arg5: memref<128x128xf32, #tpu.memory_space<vmem>>, %arg6: memref<1x128xf32, #tpu.memory_space<vmem>>, %arg7: memref<128x32xf32, #tpu.memory_space<vmem>>, %arg8: memref<1x32xf32, #tpu.memory_space<vmem>>, %arg9: memref<8x32xf32, #tpu.memory_space<vmem>>) attributes {dimension_semantics = [#tpu.dimension_semantics<parallel>], iteration_bounds = array<i64: 1>, scalar_prefetch = 0 : i64, scratch_operands = 0 : i64, tpu.core_type = #tpu.core_type<tc>, window_params = [{transform_indices = @transform_0, window_bounds = array<i64: 3>}, {transform_indices = @transform_1, window_bounds = array<i64: 8, 32>}, {pipeline_mode = #tpu.pipeline_mode<synchronous>, transform_indices = @transform_2, window_bounds = array<i64: 32, 128>}, {pipeline_mode = #tpu.pipeline_mode<synchronous>, transform_indices = @transform_3, window_bounds = array<i64: 1, 128>}, {pipeline_mode = #tpu.pipeline_mode<synchronous>, transform_indices = @transform_4, window_bounds = array<i64: 128, 128>}, {pipeline_mode = #tpu.pipeline_mode<synchronous>, transform_indices = @transform_5, window_bounds = array<i64: 1, 128>}, {pipeline_mode = #tpu.pipeline_mode<synchronous>, transform_indices = @transform_6, window_bounds = array<i64: 128, 32>}, {pipeline_mode = #tpu.pipeline_mode<synchronous>, transform_indices = @transform_7, window_bounds = array<i64: 1, 32>}, {transform_indices = @transform_8, window_bounds = array<i64: 8, 32>}]} {
    %c0 = arith.constant 0 : index
    %0 = memref.load %arg1[%c0] : memref<3xf32, #tpu.memory_space<smem>>
    %c1 = arith.constant 1 : index
    %1 = memref.load %arg1[%c1] : memref<3xf32, #tpu.memory_space<smem>>
    %c2 = arith.constant 2 : index
    %2 = memref.load %arg1[%c2] : memref<3xf32, #tpu.memory_space<smem>>
    %cst = arith.constant 1.000000e+00 : f32
    %3 = arith.subf %cst, %2 : f32
    %c0_0 = arith.constant 0 : index
    %c0_1 = arith.constant 0 : index
    %4 = vector.load %arg2[%c0_0, %c0_1] : memref<8x32xf32, #tpu.memory_space<vmem>>, vector<8x32xf32>
    %c0_2 = arith.constant 0 : index
    %c0_3 = arith.constant 0 : index
    %5 = vector.load %arg3[%c0_2, %c0_3] : memref<32x128xf32, #tpu.memory_space<vmem>>, vector<32x128xf32>
    %cst_4 = arith.constant dense<0.000000e+00> : vector<8x128xf32>
    %6 = tpu.matmul %4, %5, %cst_4 {dimension_numbers = #tpu.dot_dimension_numbers<[1], [0], [0], [1], [0, 0, 1, 1], [], []>} : vector<8x32xf32>, vector<32x128xf32>, vector<8x128xf32> -> vector<8x128xf32>
    %c0_5 = arith.constant 0 : index
    %c0_6 = arith.constant 0 : index
    %7 = vector.load %arg4[%c0_5, %c0_6] : memref<1x128xf32, #tpu.memory_space<vmem>>, vector<1x128xf32>
    %8 = vector.broadcast %7 : vector<1x128xf32> to vector<8x128xf32>
    %9 = arith.addf %6, %8 : vector<8x128xf32>
    %cst_7 = arith.constant 0.000000e+00 : f32
    %10 = vector.broadcast %cst_7 : f32 to vector<8x128xf32>
    %11 = arith.cmpf oge, %9, %10 : vector<8x128xf32>
    %12 = vector.broadcast %0 : f32 to vector<8x128xf32>
    %13 = arith.mulf %12, %9 : vector<8x128xf32>
    %14 = arith.select %11, %9, %13 : vector<8x128xi1>, vector<8x128xf32>
    %c0_8 = arith.constant 0 : index
    %c0_9 = arith.constant 0 : index
    %15 = vector.load %arg5[%c0_8, %c0_9] : memref<128x128xf32, #tpu.memory_space<vmem>>, vector<128x128xf32>
    %cst_10 = arith.constant dense<0.000000e+00> : vector<8x128xf32>
    %16 = tpu.matmul %14, %15, %cst_10 {dimension_numbers = #tpu.dot_dimension_numbers<[1], [0], [0], [1], [0, 0, 1, 1], [], []>} : vector<8x128xf32>, vector<128x128xf32>, vector<8x128xf32> -> vector<8x128xf32>
    %c0_11 = arith.constant 0 : index
    %c0_12 = arith.constant 0 : index
    %17 = vector.load %arg6[%c0_11, %c0_12] : memref<1x128xf32, #tpu.memory_space<vmem>>, vector<1x128xf32>
    %18 = vector.broadcast %17 : vector<1x128xf32> to vector<8x128xf32>
    %19 = arith.addf %16, %18 : vector<8x128xf32>
    %cst_13 = arith.constant 0.000000e+00 : f32
    %20 = vector.broadcast %cst_13 : f32 to vector<8x128xf32>
    %21 = arith.cmpf oge, %19, %20 : vector<8x128xf32>
    %22 = vector.broadcast %1 : f32 to vector<8x128xf32>
    %23 = arith.mulf %22, %19 : vector<8x128xf32>
    %24 = arith.select %21, %19, %23 : vector<8x128xi1>, vector<8x128xf32>
    %c0_14 = arith.constant 0 : index
    %c0_15 = arith.constant 0 : index
    %25 = vector.load %arg7[%c0_14, %c0_15] : memref<128x32xf32, #tpu.memory_space<vmem>>, vector<128x32xf32>
    %cst_16 = arith.constant dense<0.000000e+00> : vector<8x32xf32>
    %26 = tpu.matmul %24, %25, %cst_16 {dimension_numbers = #tpu.dot_dimension_numbers<[1], [0], [0], [1], [0, 0, 1, 1], [], []>} : vector<8x128xf32>, vector<128x32xf32>, vector<8x32xf32> -> vector<8x32xf32>
    %c0_17 = arith.constant 0 : index
    %c0_18 = arith.constant 0 : index
    %27 = vector.load %arg8[%c0_17, %c0_18] : memref<1x32xf32, #tpu.memory_space<vmem>>, vector<1x32xf32>
    %28 = vector.broadcast %27 : vector<1x32xf32> to vector<8x32xf32>
    %29 = arith.addf %26, %28 : vector<8x32xf32>
    %c0_19 = arith.constant 0 : index
    %c0_20 = arith.constant 0 : index
    %30 = vector.load %arg2[%c0_19, %c0_20] : memref<8x32xf32, #tpu.memory_space<vmem>>, vector<8x32xf32>
    %31 = vector.broadcast %2 : f32 to vector<8x32xf32>
    %32 = arith.mulf %31, %29 : vector<8x32xf32>
    %33 = vector.broadcast %3 : f32 to vector<8x32xf32>
    %34 = arith.mulf %33, %30 : vector<8x32xf32>
    %35 = arith.addf %32, %34 : vector<8x32xf32>
    %c0_21 = arith.constant 0 : index
    %c0_22 = arith.constant 0 : index
    %36 = vector.load %arg9[%c0_21, %c0_22] : memref<8x32xf32, #tpu.memory_space<vmem>>, vector<8x32xf32>
    tpu.vector_store %arg9[%c0_21, %c0_22], %35 {strides = array<i32>} : memref<8x32xf32, #tpu.memory_space<vmem>>, vector<8x32xf32>,
    return
  }
  func.func @transform_0(%arg0: i32) -> i32 {
    %c0_i32 = arith.constant 0 : i32
    %c0_i32_0 = arith.constant 0 : i32
    return %c0_i32 : i32
  }
  func.func @transform_1(%arg0: i32) -> (i32, i32) {
    %c0_i32 = arith.constant 0 : i32
    %c0_i32_0 = arith.constant 0 : i32
    return %arg0, %c0_i32 : i32, i32
  }
  func.func @transform_2(%arg0: i32) -> (i32, i32) {
    %c0_i32 = arith.constant 0 : i32
    %c0_i32_0 = arith.constant 0 : i32
    %c0_i32_1 = arith.constant 0 : i32
    return %c0_i32, %c0_i32_0 : i32, i32
  }
  func.func @transform_3(%arg0: i32) -> (i32, i32) {
    %c0_i32 = arith.constant 0 : i32
    %c0_i32_0 = arith.constant 0 : i32
    %c0_i32_1 = arith.constant 0 : i32
    return %c0_i32, %c0_i32_0 : i32, i32
  }
  func.func @transform_4(%arg0: i32) -> (i32, i32) {
    %c0_i32 = arith.constant 0 : i32
    %c0_i32_0 = arith.constant 0 : i32
    %c0_i32_1 = arith.constant 0 : i32
    return %c0_i32, %c0_i32_0 : i32, i32
  }
  func.func @transform_5(%arg0: i32) -> (i32, i32) {
    %c0_i32 = arith.constant 0 : i32
    %c0_i32_0 = arith.constant 0 : i32
    %c0_i32_1 = arith.constant 0 : i32
    return %c0_i32, %c0_i32_0 : i32, i32
  }
  func.func @transform_6(%arg0: i32) -> (i32, i32) {
    %c0_i32 = arith.constant 0 : i32
    %c0_i32_0 = arith.constant 0 : i32
    %c0_i32_1 = arith.constant 0 : i32
    return %c0_i32, %c0_i32_0 : i32, i32
  }
  func.func @transform_7(%arg0: i32) -> (i32, i32) {
    %c0_i32 = arith.constant 0 : i32
    %c0_i32_0 = arith.constant 0 : i32
    %c0_i32_1 = arith.constant 0 : i32
    return %c0_i32, %c0_i32_0 : i32, i32
  }
  func.func @transform_8(%arg0: i32) -> (i32, i32) {
    %c0_i32 = arith.constant 0 : i32
    %c0_i32_0 = arith.constant 0 : i32
    return %arg0, %c0_i32 : i32, i32
  }
}

</mosaic_0001>

<llo_original>
// kernel: tpu_custom_call.1
$region0: #{tpu_custom_call.1}
  #allocation0 [shape = 'u32[]', space=smem, size = 0x4, offset = 0x4, fixed_abs, tag = 'smem constant byte address 0x4 - core index']
  #allocation1 [shape = 'u32[72,128]{1,0:T(1,128)}', space=vmem, size = 0x9000, scoped, tag = 'internal scratch']
  %s0 = inlined_call_operand.vmem [shape: f32[3], index: 0, kind: input, shape index: {}]
  %s1 = inlined_call_operand.hbm [shape: f32[8,32], index: 1, kind: input, shape index: {}]
  %s2 = inlined_call_operand.vmem [shape: f32[32,128], index: 2, kind: input, shape index: {}]
  %s3 = inlined_call_operand.vmem [shape: f32[1,128], index: 3, kind: input, shape index: {}]
  %s4 = inlined_call_operand.vmem [shape: f32[128,128], index: 4, kind: input, shape index: {}]
  %s5 = inlined_call_operand.vmem [shape: f32[1,128], index: 5, kind: input, shape index: {}]
  %s6 = inlined_call_operand.vmem [shape: f32[128,32], index: 6, kind: input, shape index: {}]
  %s7 = inlined_call_operand.vmem [shape: f32[1,32], index: 7, kind: input, shape index: {}]
  %s8 = inlined_call_operand.hbm [shape: f32[8,32], index: 8, kind: output, shape index: {}]
  %s9 = sld [smem:[#allocation0]]
  $region50: #{tpu_custom_call.1} parent=0
    _
  %s11 = ssub.s32 1, %s9
  %s12 = scalar_select 0, %s11, %s9
  $region1: #{tpu_custom_call.1} parent=0
    #allocation2 [shape = 'u8[512]{0}', space=smem, size = 0x200, scoped, tag = 'input window, operand 0, single buffered']
    #allocation3 [shape = 's32[1]{0}', space=sflag, size = 0x4, scoped, tag = 'scoped memory for tpu_custom_call.1']
    #allocation4 [shape = 's32[1]{0}', space=sflag, size = 0x4, scoped, tag = 'scoped memory for tpu_custom_call.1']
    #allocation5 [shape = 's32[1]{0}', space=sflag, size = 0x4, scoped, tag = 'scoped memory for tpu_custom_call.1']
    #allocation6 [shape = 'u8[4096]{0}', space=vmem, size = 0x1000, scoped, tag = 'input window, operand 1, single buffered']
    #allocation7 [shape = 'u8[4096]{0}', space=vmem, size = 0x1000, scoped, tag = 'output window, operand 0, single buffered']
    %13 = vsyncpa [#allocation5], 0
    %14 = vsyncpa [#allocation3], 0
    %15 = vsyncpa [#allocation4], 0
    // Predicated region
    $region2: #{tpu_custom_call.1} parent=1 // pred_check
      _
    $region3: #{tpu_custom_call.1} parent=1 // pred_check_branch
      %17 = sbr.rel (0) target = $region5
    $region4: #{tpu_custom_call.1} parent=1 // pred_region
      %19 = vsyncadd [#allocation5], 0
      %s21 = sshll.u32 %s0, 4
      %s22 = int_to_ptr.vmem [resolvable:$true] %s21
      %24 = dma.vmem_to_smem %s22, 16, [#allocation2], [#allocation5]
    $region5: #{tpu_custom_call.1} parent=1 // pred_fallthru
      _
    // Predicated region
    $region6: #{tpu_custom_call.1} parent=1 // pred_check
      _
    $region7: #{tpu_custom_call.1} parent=1 // pred_check_branch
      %26 = sbr.rel (0) target = $region9
    $region8: #{tpu_custom_call.1} parent=1 // pred_region
      %28 = vsyncadd [#allocation3], 0
      %s30 = sshll.u32 %s1, 4
      %s31 = int_to_ptr.hbm [resolvable:$true] %s30
      %s32 = sshll.u32 [#allocation6], 4
      %s33 = int_to_ptr.vmem [resolvable:$true] %s32
      %35 = dma.hbm_to_vmem [thread:$0]  %s31, 128, %s33, [#allocation3]
    $region9: #{tpu_custom_call.1} parent=1 // pred_fallthru
      _
    // Predicated region
    $region10: #{tpu_custom_call.1} parent=1 // pred_check
      _
    $region11: #{tpu_custom_call.1} parent=1 // pred_check_branch
      %37 = sbr.rel (0) target = $region13
    $region12: #{tpu_custom_call.1} parent=1 // pred_region
      _
    $region13: #{tpu_custom_call.1} parent=1 // pred_fallthru
      _
    // Predicated region
    $region14: #{tpu_custom_call.1} parent=1 // pred_check
      _
    $region15: #{tpu_custom_call.1} parent=1 // pred_check_branch
      %39 = sbr.rel (0) target = $region17
    $region16: #{tpu_custom_call.1} parent=1 // pred_region
      _
    $region17: #{tpu_custom_call.1} parent=1 // pred_fallthru
      _
    // Predicated region
    $region18: #{tpu_custom_call.1} parent=1 // pred_check
      _
    $region19: #{tpu_custom_call.1} parent=1 // pred_check_branch
      %41 = sbr.rel (0) target = $region21
    $region20: #{tpu_custom_call.1} parent=1 // pred_region
      _
    $region21: #{tpu_custom_call.1} parent=1 // pred_fallthru
      _
    // Predicated region
    $region22: #{tpu_custom_call.1} parent=1 // pred_check
      _
    $region23: #{tpu_custom_call.1} parent=1 // pred_check_branch
      %43 = sbr.rel (0) target = $region25
    $region24: #{tpu_custom_call.1} parent=1 // pred_region
      _
    $region25: #{tpu_custom_call.1} parent=1 // pred_fallthru
      _
    // Predicated region
    $region26: #{tpu_custom_call.1} parent=1 // pred_check
      _
    $region27: #{tpu_custom_call.1} parent=1 // pred_check_branch
      %45 = sbr.rel (0) target = $region29
    $region28: #{tpu_custom_call.1} parent=1 // pred_region
      _
    $region29: #{tpu_custom_call.1} parent=1 // pred_fallthru
      _
    // Predicated region
    $region30: #{tpu_custom_call.1} parent=1 // pred_check
      _
    $region31: #{tpu_custom_call.1} parent=1 // pred_check_branch
      %47 = sbr.rel (0) target = $region33
    $region32: #{tpu_custom_call.1} parent=1 // pred_region
      _
    $region33: #{tpu_custom_call.1} parent=1 // pred_fallthru
      _
    // Predicated region
    $region34: #{tpu_custom_call.1} parent=1 // pred_check
      _
    $region35: #{tpu_custom_call.1} parent=1 // pred_check_branch
      %49 = sbr.rel (0) target = $region37
    $region36: #{tpu_custom_call.1} parent=1 // pred_region
      %51 = dma.done [#allocation5], 16
    $region37: #{tpu_custom_call.1} parent=1 // pred_fallthru
      _
    // Predicated region
    $region38: #{tpu_custom_call.1} parent=1 // pred_check
      _
    $region39: #{tpu_custom_call.1} parent=1 // pred_check_branch
      %53 = sbr.rel (0) target = $region41
    $region40: #{tpu_custom_call.1} parent=1 // pred_region
      %55 = dma.done [#allocation3], 128
    $region41: #{tpu_custom_call.1} parent=1 // pred_fallthru
      _
    %56 = sfence
    %s57 = sld [smem:[#allocation2]]
    %s58 = sld [smem:[#allocation2 + $0x1]]
    %s59 = sld [smem:[#allocation2 + $0x2]]
    %s60 = ssub.f32 1.0, %s59
    %v61 = vld [vmem:[#allocation6] sm:$0xff]
    %v62 = vld [vmem:[%s2] sm:$0xff]
    %v63 = vld [vmem:[%s2 + $0x8] sm:$0xff]
    %v64 = vld [vmem:[%s2 + $0x10] sm:$0xff]
    %v65 = vld [vmem:[%s2 + $0x18] sm:$0xff]
    %v66 = vld [vmem:[%s3] sm:$0x1]
    %v68 = vperm.slane %v66, 0
    %vm70 = vcmask 261120
    %v72 = vsel %vm70, %v61, 0
    %74 = vmatpush.msra.mxu0 0.0
    %75 = vmatpush.msra.mxu0 0.0
    %76 = vmatpush.msra.mxu0 0.0
    %77 = vmatpush.msra.mxu0 0.0
    %78 = vmatpush.msra.mxu0 0.0
    %79 = vmatpush.msra.mxu0 0.0
    %80 = vmatpush.msra.mxu0 0.0
    %81 = vmatpush.msra.mxu0 0.0
    %82 = vmatpush.msra.mxu0 0.0
    %83 = vmatpush.msra.mxu0 0.0
    %84 = vmatpush.msra.mxu0 0.0
    %85 = vmatpush.msra.mxu0 0.0
    %86 = vmatpush.msra.mxu0 %v65
    %87 = vmatpush.msra.mxu0 %v64
    %88 = vmatpush.msra.mxu0 %v63
    %89 = vmatpush.msra.mxu0 %v62
    %90 = vmatmul.f32.gmra.mxu0 %v72
    %v91 = vpop.f32.mrf.mxu0
    %v92 = vadd.f32 %v68, %v91
    %93 = vdwg.mxu0
    %vm94 = vcmp.ge.f32.partialorder %v92, 0.0
    %v95 = vstv %s57
    %v96 = vmul.f32 %v95, %v92
    %v97 = vsel %vm94, %v92, %v96
    %v98 = vld [vmem:[%s4] sm:$0xff]
    %v99 = vld [vmem:[%s4 + $0x8] sm:$0xff]
    %v100 = vld [vmem:[%s4 + $0x10] sm:$0xff]
    %v101 = vld [vmem:[%s4 + $0x18] sm:$0xff]
    %v102 = vld [vmem:[%s4 + $0x20] sm:$0xff]
    %v103 = vld [vmem:[%s4 + $0x28] sm:$0xff]
    %v104 = vld [vmem:[%s4 + $0x30] sm:$0xff]
    %v105 = vld [vmem:[%s4 + $0x38] sm:$0xff]
    %v106 = vld [vmem:[%s4 + $0x40] sm:$0xff]
    %v107 = vld [vmem:[%s4 + $0x48] sm:$0xff]
    %v108 = vld [vmem:[%s4 + $0x50] sm:$0xff]
    %v109 = vld [vmem:[%s4 + $0x58] sm:$0xff]
    %v110 = vld [vmem:[%s4 + $0x60] sm:$0xff]
    %v111 = vld [vmem:[%s4 + $0x68] sm:$0xff]
    %v112 = vld [vmem:[%s4 + $0x70] sm:$0xff]
    %v113 = vld [vmem:[%s4 + $0x78] sm:$0xff]
    %v114 = vld [vmem:[%s5] sm:$0x1]
    %v116 = vperm.slane %v114, 0
    %118 = vmatpush.msra.mxu0 %v113
    %119 = vmatpush.msra.mxu0 %v112
    %120 = vmatpush.msra.mxu0 %v111
    %121 = vmatpush.msra.mxu0 %v110
    %122 = vmatpush.msra.mxu0 %v109
    %123 = vmatpush.msra.mxu0 %v108
    %124 = vmatpush.msra.mxu0 %v107
    %125 = vmatpush.msra.mxu0 %v106
    %126 = vmatpush.msra.mxu0 %v105
    %127 = vmatpush.msra.mxu0 %v104
    %128 = vmatpush.msra.mxu0 %v103
    %129 = vmatpush.msra.mxu0 %v102
    %130 = vmatpush.msra.mxu0 %v101
    %131 = vmatpush.msra.mxu0 %v100
    %132 = vmatpush.msra.mxu0 %v99
    %133 = vmatpush.msra.mxu0 %v98
    %134 = vmatmul.f32.gmra.mxu0 %v97
    %v135 = vpop.f32.mrf.mxu0
    %v136 = vadd.f32 %v116, %v135
    %137 = vdwg.mxu0
    %vm138 = vcmp.ge.f32.partialorder %v136, 0.0
    %v139 = vstv %s58
    %v140 = vmul.f32 %v139, %v136
    %v141 = vsel %vm138, %v136, %v140
    %v142 = vld [vmem:[%s6] sm:$0xff]
    %v143 = vld [vmem:[%s6 + $0x8] sm:$0xff]
    %v144 = vld [vmem:[%s6 + $0x10] sm:$0xff]
    %v145 = vld [vmem:[%s6 + $0x18] sm:$0xff]
    %v146 = vld [vmem:[%s6 + $0x20] sm:$0xff]
    %v147 = vld [vmem:[%s6 + $0x28] sm:$0xff]
    %v148 = vld [vmem:[%s6 + $0x30] sm:$0xff]
    %v149 = vld [vmem:[%s6 + $0x38] sm:$0xff]
    %v150 = vld [vmem:[%s6 + $0x40] sm:$0xff]
    %v151 = vld [vmem:[%s6 + $0x48] sm:$0xff]
    %v152 = vld [vmem:[%s6 + $0x50] sm:$0xff]
    %v153 = vld [vmem:[%s6 + $0x58] sm:$0xff]
    %v154 = vld [vmem:[%s6 + $0x60] sm:$0xff]
    %v155 = vld [vmem:[%s6 + $0x68] sm:$0xff]
    %v156 = vld [vmem:[%s6 + $0x70] sm:$0xff]
    %v157 = vld [vmem:[%s6 + $0x78] sm:$0xff]
    %v158 = vld [vmem:[%s7] sm:$0x1]
    %v160 = vperm.slane %v158, 0
    %162 = vmatpush.msra.mxu0 %v157
    %163 = vmatpush.msra.mxu0 %v156
    %164 = vmatpush.msra.mxu0 %v155
    %165 = vmatpush.msra.mxu0 %v154
    %166 = vmatpush.msra.mxu0 %v153
    %167 = vmatpush.msra.mxu0 %v152
    %168 = vmatpush.msra.mxu0 %v151
    %169 = vmatpush.msra.mxu0 %v150
    %170 = vmatpush.msra.mxu0 %v149
    %171 = vmatpush.msra.mxu0 %v148
    %172 = vmatpush.msra.mxu0 %v147
    %173 = vmatpush.msra.mxu0 %v146
    %174 = vmatpush.msra.mxu0 %v145
    %175 = vmatpush.msra.mxu0 %v144
    %176 = vmatpush.msra.mxu0 %v143
    %177 = vmatpush.msra.mxu0 %v142
    %178 = vmatmul.f32.gmra.mxu0 %v141
    %v179 = vpop.f32.mrf.mxu0
    %v180 = vadd.f32 %v160, %v179
    %181 = vdwg.mxu0
    %v182 = vstv %s59
    %v183 = vmul.f32 %v182, %v180
    %v184 = vstv %s60
    %v185 = vmul.f32 %v184, %v61
    %v186 = vadd.f32 %v183, %v185
    %187 = vst.msk [vmem:[#allocation7] sm:$0xff] %vm70, %v186
    // Predicated region
    $region42: #{tpu_custom_call.1} parent=1 // pred_check
      _
    $region43: #{tpu_custom_call.1} parent=1 // pred_check_branch
      %189 = sbr.rel (0) target = $region45
    $region44: #{tpu_custom_call.1} parent=1 // pred_region
      %191 = vsyncadd [#allocation4], 0
      %s193 = sshll.u32 [#allocation7], 4
      %s194 = int_to_ptr.vmem [resolvable:$true] %s193
      %s195 = sshll.u32 %s8, 4
      %s196 = int_to_ptr.hbm [resolvable:$true] %s195
      %198 = dma.vmem_to_hbm [thread:$0]  %s194, 128, %s196, [#allocation4]
    $region45: #{tpu_custom_call.1} parent=1 // pred_fallthru
      _
    // Predicated region
    $region46: #{tpu_custom_call.1} parent=1 // pred_check
      _
    $region47: #{tpu_custom_call.1} parent=1 // pred_check_branch
      %200 = sbr.rel (0) target = $region49
    $region48: #{tpu_custom_call.1} parent=1 // pred_region
      %202 = dma.done [#allocation4], 128
    $region49: #{tpu_custom_call.1} parent=1 // pred_fallthru
      _
    %203 = vsyncpa [#allocation3], 1
    %204 = vsyncpa [#allocation4], 1
    %205 = vsyncpa [#allocation5], 1

</llo_original>
